<compile_context>
chip_gen: v7x
topology: tpu7x:2x2x1
jax: 0.10.0
libtpu: 0.0.40
codegen_flags: <defaults>
</compile_context>

<pallas_src>
import functools

import jax
import jax.numpy as jnp
from jax.experimental import pallas as pl
from jax.experimental.pallas import tpu as pltpu

# Packing layout of the flat (22,) f32 parameter vector (SMEM resident):
#   [0:3)   w1[0, f]              fc1 weight  (in=1, out=3)
#   [3:6)   b1[f]                 fc1 bias
#   [6:15)  w2[f, g] at f*3 + g   fc2 weight  (in=3, out=3)
#   [15:18) b2[g]                 fc2 bias
#   [18:21) w3[g, 0]              fc3 weight  (in=3, out=1)
#   [21]    b3                    fc3 bias
_W1, _B1, _W2, _B2, _W3, _B3 = 0, 3, 6, 15, 18, 21

_LANES = 128
_SUBLANE = 16                      # multiple-of-16 rows is valid for f32 and bf16 tiles alike
DEFAULT_TARGET_TILE_ROWS = 8192    # (8192,128) f32 tile = 4 MiB; ~16 MiB with in+out double-buffered
_VMEM_LIMIT_BYTES = 32 * 1024 * 1024  # safe on v5e/v6e (128 MiB phys) and v7x (64 MiB phys)

_COMPUTE_DTYPES = {"float32": jnp.float32, "bfloat16": jnp.bfloat16}


def mlp_kernel(p_ref, x_ref, o_ref, *, compute_dtype):
    """Whole 1-3-3-1 MLP as VPU broadcast multiply-add / max chains on one tile.

    p_ref: (22,) f32 in SMEM (scalar-prefetched once, resident across the grid).
    x_ref, o_ref: (tile_rows, 128) VMEM tiles (batch laid out on lanes + sublanes).
    """
    cdt = _COMPUTE_DTYPES[compute_dtype]
    p = lambda i: p_ref[i].astype(cdt)     # scalar param in compute dtype
    x = x_ref[...].astype(cdt)             # (tile_rows, 128)

    # fc1 + ReLU: h1[f] = relu(x * w1[f] + b1[f])   (statically unrolled, 3 units)
    h1 = [jnp.maximum(x * p(_W1 + f) + p(_B1 + f), 0.0) for f in range(3)]

    # fc2 + ReLU: h2[g] = relu(sum_f h1[f] * w2[f, g] + b2[g])
    h2 = []
    for g in range(3):
        acc = h1[0] * p(_W2 + 0 * 3 + g)
        acc = acc + h1[1] * p(_W2 + 1 * 3 + g)
        acc = acc + h1[2] * p(_W2 + 2 * 3 + g)
        h2.append(jnp.maximum(acc + p(_B2 + g), 0.0))

    # fc3: y = sum_g h2[g] * w3[g] + b3
    y = h2[0] * p(_W3 + 0) + h2[1] * p(_W3 + 1) + h2[2] * p(_W3 + 2) + p(_B3)
    o_ref[...] = y.astype(o_ref.dtype)


def _round_up(n, m):
    return (n + m - 1) // m * m


def pack_params(params):
    """Flatten w1,b1,w2,b2,w3,b3 (stored (in,out) / (1,out)) into a (22,) f32 vector."""
    return jnp.concatenate([
        params["w1"].reshape(-1), params["b1"].reshape(-1),
        params["w2"].reshape(-1), params["b2"].reshape(-1),
        params["w3"].reshape(-1), params["b3"].reshape(-1),
    ]).astype(jnp.float32)


@functools.partial(jax.jit, static_argnames=("target_tile_rows", "compute_dtype"))
def torch_mlp_forward(x, params, *, target_tile_rows=DEFAULT_TARGET_TILE_ROWS,
                      compute_dtype="float32"):
    """x: (B, 1). Returns (B, 1) in x.dtype, matching TorchMLP.forward."""
    B = x.shape[0]
    packed = pack_params(params)

    # Lane-dense layout: batch flattened onto (rows, 128), rows sublane-aligned.
    rows = _round_up(max(-(-B // _LANES), 1), _SUBLANE)

    # Grid selection:
    #   (a) divide the batch tightly (no dead tiles),
    #   (b) >=2 grid steps whenever possible so v7x shards the "parallel" axis
    #       across both TensorCores,
    #   (c) ~target_tile_rows-sized tiles to amortize per-step overhead.
    if rows >= 2 * _SUBLANE:
        num_tiles = max(2, -(-rows // target_tile_rows))
    else:
        num_tiles = 1
    tile_rows = _round_up(-(-rows // num_tiles), _SUBLANE)
    padded_rows = num_tiles * tile_rows

    # Pad only when B is ragged; in the aligned common case the reshape is free
    # (no extra HBM pass before the kernel).
    x_flat = x.reshape(-1)
    pad = padded_rows * _LANES - B
    if pad:
        x_flat = jnp.pad(x_flat, (0, pad))
    x2d = x_flat.reshape(padded_rows, _LANES)

    out2d = pl.pallas_call(
        functools.partial(mlp_kernel, compute_dtype=compute_dtype),
        out_shape=jax.ShapeDtypeStruct((padded_rows, _LANES), x.dtype),
        grid_spec=pltpu.PrefetchScalarGridSpec(
            num_scalar_prefetch=1,          # packed params -> SMEM, loaded once
            grid=(num_tiles,),
            in_specs=[pl.BlockSpec((tile_rows, _LANES), lambda i, p: (i, 0))],
            out_specs=pl.BlockSpec((tile_rows, _LANES), lambda i, p: (i, 0)),
        ),
        compiler_params=pltpu.CompilerParams(
            dimension_semantics=("parallel",),   # batch axis: shard across TCs on v7x
            vmem_limit_bytes=_VMEM_LIMIT_BYTES,
        ),
    )(packed, x2d)

    out_flat = out2d.reshape(-1)
    if pad:
        out_flat = out_flat[:B]
    return out_flat.reshape(B, 1)


def init_params(key):
    """Deterministic init mimicking nn.Linear's uniform(-1/sqrt(fan_in), +1/sqrt(fan_in))."""
    def linear(key, fan_in, fan_out):
        kw, kb = jax.random.split(key)
        bound = 1.0 / jnp.sqrt(jnp.float32(fan_in))
        w = jax.random.uniform(kw, (fan_in, fan_out), jnp.float32, -bound, bound)  # (in, out)
        b = jax.random.uniform(kb, (1, fan_out), jnp.float32, -bound, bound)
        return w, b

    k1, k2, k3 = jax.random.split(key, 3)
    w1, b1 = linear(k1, 1, 3)
    w2, b2 = linear(k2, 3, 3)
    w3, b3 = linear(k3, 3, 1)
    return {"w1": w1, "b1": b1, "w2": w2, "b2": b2, "w3": w3, "b3": b3}


def reference_forward(x, p):
    h = jnp.maximum(x @ p["w1"] + p["b1"], 0.0)
    h = jnp.maximum(h @ p["w2"] + p["b2"], 0.0)
    return h @ p["w3"] + p["b3"]


if __name__ == "__main__":
    key = jax.random.PRNGKey(0)
    kx, kp = jax.random.split(key)

    B = 8
    x = jax.random.normal(kx, (B, 1), jnp.float32)
    params = init_params(kp)
    ref = reference_forward(x, params)

    # Default f32 compute path (exact; required on v5e which has no bf16 VPU).
    out = jax.block_until_ready(torch_mlp_forward(x, params))
    assert out.shape == (B, 1)
    assert jnp.allclose(out, ref, atol=1e-5, rtol=1e-5), "f32 path mismatch vs reference"

    # bf16 compute path (recommended on v6e/v7x: ~halves VALU vreg-op count).
    out_bf16 = jax.block_until_ready(torch_mlp_forward(x, params, compute_dtype="bfloat16"))
    assert out_bf16.shape == (B, 1)
    assert jnp.allclose(out_bf16, ref, atol=1e-1, rtol=1e-1), "bf16 path mismatch vs reference"

    # Ragged, multi-tile exercise: checks tight tile selection, >=2-step grid and tail padding.
    B2 = 5000
    x2 = jax.random.normal(kx, (B2, 1), jnp.float32)
    out2 = jax.block_until_ready(torch_mlp_forward(x2, params, target_tile_rows=16))
    assert out2.shape == (B2, 1)
    assert jnp.allclose(out2, reference_forward(x2, params), atol=1e-5, rtol=1e-5), \
        "multi-tile path mismatch vs reference"

    print("KERNEL_OK")
</pallas_src>

<mosaic_0001>
module attributes {stable_mosaic.version = 11 : i64} {
  func.func @mlp_kernel(%arg0: i32, %arg1: memref<22xf32, #tpu.memory_space<smem>>, %arg2: memref<16x128xf32, #tpu.memory_space<vmem>>, %arg3: memref<16x128xf32, #tpu.memory_space<vmem>>) attributes {dimension_semantics = [#tpu.dimension_semantics<parallel>], iteration_bounds = array<i64: 1>, scalar_prefetch = 1 : i64, scratch_operands = 0 : i64, tpu.core_type = #tpu.core_type<tc>, window_params = [{transform_indices = @transform_0, window_bounds = array<i64: 16, 128>}, {transform_indices = @transform_1, window_bounds = array<i64: 16, 128>}]} {
    %c0 = arith.constant 0 : index
    %c0_0 = arith.constant 0 : index
    %0 = vector.load %arg2[%c0, %c0_0] : memref<16x128xf32, #tpu.memory_space<vmem>>, vector<16x128xf32>
    %c0_1 = arith.constant 0 : index
    %1 = memref.load %arg1[%c0_1] : memref<22xf32, #tpu.memory_space<smem>>
    %2 = vector.broadcast %1 : f32 to vector<16x128xf32>
    %3 = arith.mulf %0, %2 : vector<16x128xf32>
    %c3 = arith.constant 3 : index
    %4 = memref.load %arg1[%c3] : memref<22xf32, #tpu.memory_space<smem>>
    %5 = vector.broadcast %4 : f32 to vector<16x128xf32>
    %6 = arith.addf %3, %5 : vector<16x128xf32>
    %cst = arith.constant 0.000000e+00 : f32
    %7 = vector.broadcast %cst : f32 to vector<16x128xf32>
    %8 = arith.maximumf %6, %7 : vector<16x128xf32>
    %c1 = arith.constant 1 : index
    %9 = memref.load %arg1[%c1] : memref<22xf32, #tpu.memory_space<smem>>
    %10 = vector.broadcast %9 : f32 to vector<16x128xf32>
    %11 = arith.mulf %0, %10 : vector<16x128xf32>
    %c4 = arith.constant 4 : index
    %12 = memref.load %arg1[%c4] : memref<22xf32, #tpu.memory_space<smem>>
    %13 = vector.broadcast %12 : f32 to vector<16x128xf32>
    %14 = arith.addf %11, %13 : vector<16x128xf32>
    %cst_2 = arith.constant 0.000000e+00 : f32
    %15 = vector.broadcast %cst_2 : f32 to vector<16x128xf32>
    %16 = arith.maximumf %14, %15 : vector<16x128xf32>
    %c2 = arith.constant 2 : index
    %17 = memref.load %arg1[%c2] : memref<22xf32, #tpu.memory_space<smem>>
    %18 = vector.broadcast %17 : f32 to vector<16x128xf32>
    %19 = arith.mulf %0, %18 : vector<16x128xf32>
    %c5 = arith.constant 5 : index
    %20 = memref.load %arg1[%c5] : memref<22xf32, #tpu.memory_space<smem>>
    %21 = vector.broadcast %20 : f32 to vector<16x128xf32>
    %22 = arith.addf %19, %21 : vector<16x128xf32>
    %cst_3 = arith.constant 0.000000e+00 : f32
    %23 = vector.broadcast %cst_3 : f32 to vector<16x128xf32>
    %24 = arith.maximumf %22, %23 : vector<16x128xf32>
    %c6 = arith.constant 6 : index
    %25 = memref.load %arg1[%c6] : memref<22xf32, #tpu.memory_space<smem>>
    %26 = vector.broadcast %25 : f32 to vector<16x128xf32>
    %27 = arith.mulf %8, %26 : vector<16x128xf32>
    %c9 = arith.constant 9 : index
    %28 = memref.load %arg1[%c9] : memref<22xf32, #tpu.memory_space<smem>>
    %29 = vector.broadcast %28 : f32 to vector<16x128xf32>
    %30 = arith.mulf %16, %29 : vector<16x128xf32>
    %31 = arith.addf %27, %30 : vector<16x128xf32>
    %c12 = arith.constant 12 : index
    %32 = memref.load %arg1[%c12] : memref<22xf32, #tpu.memory_space<smem>>
    %33 = vector.broadcast %32 : f32 to vector<16x128xf32>
    %34 = arith.mulf %24, %33 : vector<16x128xf32>
    %35 = arith.addf %31, %34 : vector<16x128xf32>
    %c15 = arith.constant 15 : index
    %36 = memref.load %arg1[%c15] : memref<22xf32, #tpu.memory_space<smem>>
    %37 = vector.broadcast %36 : f32 to vector<16x128xf32>
    %38 = arith.addf %35, %37 : vector<16x128xf32>
    %cst_4 = arith.constant 0.000000e+00 : f32
    %39 = vector.broadcast %cst_4 : f32 to vector<16x128xf32>
    %40 = arith.maximumf %38, %39 : vector<16x128xf32>
    %c7 = arith.constant 7 : index
    %41 = memref.load %arg1[%c7] : memref<22xf32, #tpu.memory_space<smem>>
    %42 = vector.broadcast %41 : f32 to vector<16x128xf32>
    %43 = arith.mulf %8, %42 : vector<16x128xf32>
    %c10 = arith.constant 10 : index
    %44 = memref.load %arg1[%c10] : memref<22xf32, #tpu.memory_space<smem>>
    %45 = vector.broadcast %44 : f32 to vector<16x128xf32>
    %46 = arith.mulf %16, %45 : vector<16x128xf32>
    %47 = arith.addf %43, %46 : vector<16x128xf32>
    %c13 = arith.constant 13 : index
    %48 = memref.load %arg1[%c13] : memref<22xf32, #tpu.memory_space<smem>>
    %49 = vector.broadcast %48 : f32 to vector<16x128xf32>
    %50 = arith.mulf %24, %49 : vector<16x128xf32>
    %51 = arith.addf %47, %50 : vector<16x128xf32>
    %c16 = arith.constant 16 : index
    %52 = memref.load %arg1[%c16] : memref<22xf32, #tpu.memory_space<smem>>
    %53 = vector.broadcast %52 : f32 to vector<16x128xf32>
    %54 = arith.addf %51, %53 : vector<16x128xf32>
    %cst_5 = arith.constant 0.000000e+00 : f32
    %55 = vector.broadcast %cst_5 : f32 to vector<16x128xf32>
    %56 = arith.maximumf %54, %55 : vector<16x128xf32>
    %c8 = arith.constant 8 : index
    %57 = memref.load %arg1[%c8] : memref<22xf32, #tpu.memory_space<smem>>
    %58 = vector.broadcast %57 : f32 to vector<16x128xf32>
    %59 = arith.mulf %8, %58 : vector<16x128xf32>
    %c11 = arith.constant 11 : index
    %60 = memref.load %arg1[%c11] : memref<22xf32, #tpu.memory_space<smem>>
    %61 = vector.broadcast %60 : f32 to vector<16x128xf32>
    %62 = arith.mulf %16, %61 : vector<16x128xf32>
    %63 = arith.addf %59, %62 : vector<16x128xf32>
    %c14 = arith.constant 14 : index
    %64 = memref.load %arg1[%c14] : memref<22xf32, #tpu.memory_space<smem>>
    %65 = vector.broadcast %64 : f32 to vector<16x128xf32>
    %66 = arith.mulf %24, %65 : vector<16x128xf32>
    %67 = arith.addf %63, %66 : vector<16x128xf32>
    %c17 = arith.constant 17 : index
    %68 = memref.load %arg1[%c17] : memref<22xf32, #tpu.memory_space<smem>>
    %69 = vector.broadcast %68 : f32 to vector<16x128xf32>
    %70 = arith.addf %67, %69 : vector<16x128xf32>
    %cst_6 = arith.constant 0.000000e+00 : f32
    %71 = vector.broadcast %cst_6 : f32 to vector<16x128xf32>
    %72 = arith.maximumf %70, %71 : vector<16x128xf32>
    %c18 = arith.constant 18 : index
    %73 = memref.load %arg1[%c18] : memref<22xf32, #tpu.memory_space<smem>>
    %74 = vector.broadcast %73 : f32 to vector<16x128xf32>
    %75 = arith.mulf %40, %74 : vector<16x128xf32>
    %c19 = arith.constant 19 : index
    %76 = memref.load %arg1[%c19] : memref<22xf32, #tpu.memory_space<smem>>
    %77 = vector.broadcast %76 : f32 to vector<16x128xf32>
    %78 = arith.mulf %56, %77 : vector<16x128xf32>
    %79 = arith.addf %75, %78 : vector<16x128xf32>
    %c20 = arith.constant 20 : index
    %80 = memref.load %arg1[%c20] : memref<22xf32, #tpu.memory_space<smem>>
    %81 = vector.broadcast %80 : f32 to vector<16x128xf32>
    %82 = arith.mulf %72, %81 : vector<16x128xf32>
    %83 = arith.addf %79, %82 : vector<16x128xf32>
    %c21 = arith.constant 21 : index
    %84 = memref.load %arg1[%c21] : memref<22xf32, #tpu.memory_space<smem>>
    %85 = vector.broadcast %84 : f32 to vector<16x128xf32>
    %86 = arith.addf %83, %85 : vector<16x128xf32>
    %c0_7 = arith.constant 0 : index
    %c0_8 = arith.constant 0 : index
    %87 = vector.load %arg3[%c0_7, %c0_8] : memref<16x128xf32, #tpu.memory_space<vmem>>, vector<16x128xf32>
    tpu.vector_store %arg3[%c0_7, %c0_8], %86 {strides = array<i32>} : memref<16x128xf32, #tpu.memory_space<vmem>>, vector<16x128xf32>,
    return
  }
  func.func @transform_0(%arg0: i32, %arg1: memref<22xf32, #tpu.memory_space<smem>>) -> (i32, i32) {
    %c0_i32 = arith.constant 0 : i32
    %c0_i32_0 = arith.constant 0 : i32
    return %arg0, %c0_i32 : i32, i32
  }
  func.func @transform_1(%arg0: i32, %arg1: memref<22xf32, #tpu.memory_space<smem>>) -> (i32, i32) {
    %c0_i32 = arith.constant 0 : i32
    %c0_i32_0 = arith.constant 0 : i32
    return %arg0, %c0_i32 : i32, i32
  }
}

</mosaic_0001>

<llo_original>
// kernel: torch_mlp_forward.1
$region0: #{torch_mlp_forward.1}
  #allocation0 [shape = 'u32[]', space=smem, size = 0x4, offset = 0x4, fixed_abs, tag = 'smem constant byte address 0x4 - core index']
  #allocation1 [shape = 'u32[144,128]{1,0:T(1,128)}', space=vmem, size = 0x12000, scoped, tag = 'internal scratch']
  #allocation2 [shape = 's32[1]{0}', space=sflag, size = 0x4, scoped, tag = 'scoped memory for torch_mlp_forward.1']
  #allocation3 [shape = 'u8[512]{0}', space=smem, size = 0x200, scoped, tag = 'prefetched SMEM operand 0']
  %s0 = inlined_call_operand.vmem [shape: f32[22], index: 0, kind: input, shape index: {}]
  %s1 = inlined_call_operand.vmem [shape: f32[16,128], index: 1, kind: input, shape index: {}]
  %s2 = inlined_call_operand.vmem [shape: f32[16,128], index: 2, kind: output, shape index: {}]
  %s3 = sld [smem:[#allocation0]]
  $region14: #{torch_mlp_forward.1} parent=0
    _
  %s5 = ssub.s32 1, %s3
  %s6 = scalar_select 0, %s5, %s3
  %s7 = sshll.u32 %s0, 4
  %s8 = int_to_ptr.vmem [resolvable:$true] %s7
  %10 = dma.vmem_to_smem %s8, 16, [#allocation3], [#allocation2]
  %11 = dma.done [#allocation2], 16
  %12 = sfence
  // Predicated region
  $region2: #{torch_mlp_forward.1} parent=0 // pred_check
    _
  $region3: #{torch_mlp_forward.1} parent=0 // pred_check_branch
    %14 = sbr.rel (0) target = $region5
  $region4: #{torch_mlp_forward.1} parent=0 // pred_region
    _
  $region5: #{torch_mlp_forward.1} parent=0 // pred_fallthru
    _
  %v15 = vld [vmem:[%s1] sm:$0xff]
  %v16 = vld [vmem:[%s1 + $0x8] sm:$0xff]
  %s17 = sld [smem:[#allocation3]]
  %v18 = vstv %s17
  %v19 = vmul.f32 %v15, %v18
  %v20 = vmul.f32 %v16, %v18
  %s21 = sld [smem:[#allocation3 + $0x3]]
  %v22 = vstv %s21
  %v23 = vadd.f32 %v19, %v22
  %v24 = vadd.f32 %v20, %v22
  %v25 = vmax.f32 %v23, 0.0
  %v26 = vmax.f32 %v24, 0.0
  %s27 = sld [smem:[#allocation3 + $0x1]]
  %v28 = vstv %s27
  %v29 = vmul.f32 %v15, %v28
  %v30 = vmul.f32 %v16, %v28
  %s31 = sld [smem:[#allocation3 + $0x4]]
  %v32 = vstv %s31
  %v33 = vadd.f32 %v29, %v32
  %v34 = vadd.f32 %v30, %v32
  %v35 = vmax.f32 %v33, 0.0
  %v36 = vmax.f32 %v34, 0.0
  %s37 = sld [smem:[#allocation3 + $0x2]]
  %v38 = vstv %s37
  %v39 = vmul.f32 %v15, %v38
  %v40 = vmul.f32 %v16, %v38
  %s41 = sld [smem:[#allocation3 + $0x5]]
  %v42 = vstv %s41
  %v43 = vadd.f32 %v39, %v42
  %v44 = vadd.f32 %v40, %v42
  %v45 = vmax.f32 %v43, 0.0
  %v46 = vmax.f32 %v44, 0.0
  %s47 = sld [smem:[#allocation3 + $0x6]]
  %v48 = vstv %s47
  %v49 = vmul.f32 %v25, %v48
  %v50 = vmul.f32 %v26, %v48
  %s51 = sld [smem:[#allocation3 + $0x9]]
  %v52 = vstv %s51
  %v53 = vmul.f32 %v35, %v52
  %v54 = vmul.f32 %v36, %v52
  %v55 = vadd.f32 %v49, %v53
  %v56 = vadd.f32 %v50, %v54
  %s57 = sld [smem:[#allocation3 + $0xc]]
  %v58 = vstv %s57
  %v59 = vmul.f32 %v45, %v58
  %v60 = vmul.f32 %v46, %v58
  %v61 = vadd.f32 %v55, %v59
  %v62 = vadd.f32 %v56, %v60
  %s63 = sld [smem:[#allocation3 + $0xf]]
  %v64 = vstv %s63
  %v65 = vadd.f32 %v61, %v64
  %v66 = vadd.f32 %v62, %v64
  %v67 = vmax.f32 %v65, 0.0
  %v68 = vmax.f32 %v66, 0.0
  %s69 = sld [smem:[#allocation3 + $0x7]]
  %v70 = vstv %s69
  %v71 = vmul.f32 %v25, %v70
  %v72 = vmul.f32 %v26, %v70
  %s73 = sld [smem:[#allocation3 + $0xa]]
  %v74 = vstv %s73
  %v75 = vmul.f32 %v35, %v74
  %v76 = vmul.f32 %v36, %v74
  %v77 = vadd.f32 %v71, %v75
  %v78 = vadd.f32 %v72, %v76
  %s79 = sld [smem:[#allocation3 + $0xd]]
  %v80 = vstv %s79
  %v81 = vmul.f32 %v45, %v80
  %v82 = vmul.f32 %v46, %v80
  %v83 = vadd.f32 %v77, %v81
  %v84 = vadd.f32 %v78, %v82
  %s85 = sld [smem:[#allocation3 + $0x10]]
  %v86 = vstv %s85
  %v87 = vadd.f32 %v83, %v86
  %v88 = vadd.f32 %v84, %v86
  %v89 = vmax.f32 %v87, 0.0
  %v90 = vmax.f32 %v88, 0.0
  %s91 = sld [smem:[#allocation3 + $0x8]]
  %v92 = vstv %s91
  %v93 = vmul.f32 %v25, %v92
  %v94 = vmul.f32 %v26, %v92
  %s95 = sld [smem:[#allocation3 + $0xb]]
  %v96 = vstv %s95
  %v97 = vmul.f32 %v35, %v96
  %v98 = vmul.f32 %v36, %v96
  %v99 = vadd.f32 %v93, %v97
  %v100 = vadd.f32 %v94, %v98
  %s101 = sld [smem:[#allocation3 + $0xe]]
  %v102 = vstv %s101
  %v103 = vmul.f32 %v45, %v102
  %v104 = vmul.f32 %v46, %v102
  %v105 = vadd.f32 %v99, %v103
  %v106 = vadd.f32 %v100, %v104
  %s107 = sld [smem:[#allocation3 + $0x11]]
  %v108 = vstv %s107
  %v109 = vadd.f32 %v105, %v108
  %v110 = vadd.f32 %v106, %v108
  %v111 = vmax.f32 %v109, 0.0
  %v112 = vmax.f32 %v110, 0.0
  %s113 = sld [smem:[#allocation3 + $0x12]]
  %v114 = vstv %s113
  %v115 = vmul.f32 %v67, %v114
  %v116 = vmul.f32 %v68, %v114
  %s117 = sld [smem:[#allocation3 + $0x13]]
  %v118 = vstv %s117
  %v119 = vmul.f32 %v89, %v118
  %v120 = vmul.f32 %v90, %v118
  %v121 = vadd.f32 %v115, %v119
  %v122 = vadd.f32 %v116, %v120
  %s123 = sld [smem:[#allocation3 + $0x14]]
  %v124 = vstv %s123
  %v125 = vmul.f32 %v111, %v124
  %v126 = vmul.f32 %v112, %v124
  %v127 = vadd.f32 %v121, %v125
  %v128 = vadd.f32 %v122, %v126
  %s129 = sld [smem:[#allocation3 + $0x15]]
  %v130 = vstv %s129
  %v131 = vadd.f32 %v127, %v130
  %v132 = vadd.f32 %v128, %v130
  %133 = vst [vmem:[%s2] sm:$0xff] %v131
  %134 = vst [vmem:[%s2 + $0x8] sm:$0xff] %v132
  // Predicated region
  $region6: #{torch_mlp_forward.1} parent=0 // pred_check
    _
  $region7: #{torch_mlp_forward.1} parent=0 // pred_check_branch
    %136 = sbr.rel (0) target = $region9
  $region8: #{torch_mlp_forward.1} parent=0 // pred_region
    _
  $region9: #{torch_mlp_forward.1} parent=0 // pred_fallthru
    _
  // Predicated region
  $region10: #{torch_mlp_forward.1} parent=0 // pred_check
    _
  $region11: #{torch_mlp_forward.1} parent=0 // pred_check_branch
    %138 = sbr.rel (0) target = $region13
  $region12: #{torch_mlp_forward.1} parent=0 // pred_region
    _
  $region13: #{torch_mlp_forward.1} parent=0 // pred_fallthru
    _

</llo_original>
